<compile_context>
chip_gen: v7x
topology: tpu7x:2x2x1
jax: 0.10.0
libtpu: 0.0.40
codegen_flags: <defaults>
</compile_context>

<pallas_src>
import functools

import jax
import jax.numpy as jnp
from jax.experimental import pallas as pl
from jax.experimental.pallas import tpu as pltpu


def _round_up(x, m):
    return (x + m - 1) // m * m


def _conv1d_circ_kernel(x_ref, w_ref, b_ref, o_ref, *, seq_len):
    """One batch-chunk grid step.

    x_ref: (M, Cin)      M = bt*seq_len rows (whole batch rows), MXU operand dtype
    w_ref: (Cin, 3*Cout) taps concatenated along columns [W0^T | W1^T | W2^T] (VMEM-resident)
    b_ref: (1, Cout)     f32 bias (VMEM-resident)
    o_ref: (M, Cout)     output dtype
    """
    m = x_ref.shape[0]
    c_out = o_ref.shape[1]

    # Single block-level MXU pass over all three taps, f32 accumulation.
    p = jnp.dot(x_ref[...], w_ref[...], preferred_element_type=jnp.float32)
    p0 = p[:, :c_out]               # tap k=0 -> needs time offset -2
    p1 = p[:, c_out:2 * c_out]      # tap k=1 -> offset 0
    p2 = p[:, 2 * c_out:]           # tap k=2 -> needs time offset +2

    # Per-batch-row circular shift of the flat products.  A naive roll of the flattened
    # product would wrap data across batch rows; instead roll both wrap candidates (XLU,
    # has slack here) and select by the within-row phase t = r mod L (VPU).
    rows = jax.lax.broadcasted_iota(jnp.int32, (m, 1), 0)
    if (seq_len & (seq_len - 1)) == 0:        # power-of-two L: cheap masking
        t = rows & (seq_len - 1)
    else:
        t = rows % seq_len
    y0 = jnp.where(t < 2,
                   pltpu.roll(p0, (2 - seq_len) % m, 0),   # wrap stays inside the batch row
                   pltpu.roll(p0, 2 % m, 0))
    y2 = jnp.where(t >= seq_len - 2,
                   pltpu.roll(p2, (seq_len - 2) % m, 0),
                   pltpu.roll(p2, (m - 2) % m, 0))

    # Bias broadcast emitted once for the whole block (no per-row re-broadcast).
    y = y0 + p1 + y2 + b_ref[...]
    o_ref[...] = y.astype(o_ref.dtype)


def prepare_params(weight, bias, compute_dtype):
    """Conv1d weight (c_out, c_in, 3) -> fused (c_in, 3*c_out); bias -> (1, c_out) f32.

    Column group k of the fused matrix is W[:, :, k]^T, so a single matmul evaluates all
    three taps at once.  Hoist out of hot loops (or let jit constant-fold it)."""
    c_out, c_in, ks = weight.shape
    w_fused = jnp.transpose(weight, (1, 2, 0)).reshape(c_in, ks * c_out).astype(compute_dtype)
    b2 = bias.reshape(1, c_out).astype(jnp.float32)
    return w_fused, b2


def _vmem_info():
    """(physical VMEM bytes, budget for the pipelined blocks), generation-aware."""
    try:
        info = pltpu.get_tpu_info()
        cap = int(getattr(info, "vmem_capacity_bytes", 64 << 20))
    except Exception:
        cap = 64 << 20          # conservative fallback (v7x-sized)
    cap = max(cap, 32 << 20)
    # ~1/4 of physical VMEM for double-buffered blocks (32 MiB on v5e/v6e's 128 MiB,
    # 16 MiB on v7x's 64 MiB); the rest is headroom for intermediates + compiler scratch.
    return cap, cap // 4


def _block_footprint_bytes(bt, seq_len, c_in, c_out, in_isz, w_isz, out_isz):
    """Padded VMEM footprint of one grid step (lanes -> 128, sublanes -> dtype tile)."""
    def rows(n, itemsize):
        return _round_up(n, 8 * max(1, 4 // itemsize))
    m = bt * seq_len
    cin_l = _round_up(c_in, 128)
    cout_l = _round_up(c_out, 128)
    c3_l = _round_up(3 * c_out, 128)
    x_blk = 2 * rows(m, in_isz) * cin_l * in_isz          # double-buffered input block
    o_blk = 2 * rows(m, out_isz) * cout_l * out_isz       # double-buffered output block
    w_blk = 2 * rows(c_in, w_isz) * c3_l * w_isz          # resident fused weights
    b_blk = 2 * 8 * cout_l * 4                            # resident bias
    interm = rows(m, 4) * (c3_l + 4 * cout_l) * 4         # p + roll/select f32 temporaries
    return x_blk + o_blk + w_blk + b_blk + interm


def _pick_block_b(B, seq_len, c_in, c_out, in_isz, w_isz, out_isz, budget, *, max_rows=8192):
    """Largest batch chunk whose padded footprint fits the VMEM budget.

    Block rows (bt*L) stay a multiple of 16 (sublane tile for bf16 inputs / f32 outputs)
    unless the block spans the whole batch; >=2 grid steps are preferred when the blocks are
    still DMA-sized so the batch axis can shard across v7x's two TensorCores."""
    fp = lambda bt: _block_footprint_bytes(bt, seq_len, c_in, c_out, in_isz, w_isz, out_isz)
    cands = sorted({bt for bt in range(1, B + 1)
                    if (bt * seq_len) % 16 == 0 and bt * seq_len <= max_rows} | {B})
    fits = [bt for bt in cands if fp(bt) <= budget]
    if not fits:
        # TODO(synk): L-tiled circular-halo path for very long L (v7x, 64 MiB VMEM); for now
        # fall back to the smallest legal block and rely on the raised vmem limit.
        fits = [cands[0]]
    multi = [bt for bt in fits if -(-B // bt) >= 2]
    if multi and fp(max(multi)) >= min(budget, 4 << 20):
        return max(multi)
    return max(fits)


def linear_forward(x, weight, bias, *, compute_dtype=jnp.bfloat16, block_b=None):
    """x: (B, L, c_in); weight: (c_out, c_in, 3) [PyTorch Conv1d layout]; bias: (c_out,).

    compute_dtype: MXU operand dtype for x / W (default bf16 — MXU-native on v5e/v6e/v7x).
    Accumulation and bias are f32; output dtype matches x.dtype."""
    B, L, c_in = x.shape
    c_out = weight.shape[0]
    assert weight.shape == (c_out, c_in, 3), weight.shape
    assert L >= 2, "circular padding of 2 needs seq length >= 2"

    out_dtype = x.dtype
    cd = jnp.dtype(compute_dtype)
    w_fused, b2 = prepare_params(weight, bias, cd)

    vmem_cap, budget = _vmem_info()
    in_isz, w_isz, out_isz = cd.itemsize, cd.itemsize, jnp.dtype(out_dtype).itemsize
    if block_b is None:
        bt = _pick_block_b(B, L, c_in, c_out, in_isz, w_isz, out_isz, budget)
    else:
        bt = int(block_b)
        assert bt >= 1 and ((bt * L) % 16 == 0 or bt >= B), (
            "block_b*L must be a multiple of 16 unless the block spans the whole batch")

    steps = -(-B // bt)
    B_pad = steps * bt

    xq = x.astype(cd)                       # bf16 in HBM for the kernel input (review item)
    if B_pad != B:                          # ragged batch: pad, then slice the output
        xq = jnp.pad(xq, ((0, B_pad - B), (0, 0), (0, 0)))
    x2d = xq.reshape(B_pad * L, c_in)       # flat rows; each grid step owns bt whole batch rows

    m_blk = bt * L
    out2d = pl.pallas_call(
        functools.partial(_conv1d_circ_kernel, seq_len=L),
        out_shape=jax.ShapeDtypeStruct((B_pad * L, c_out), out_dtype),
        grid_spec=pltpu.PrefetchScalarGridSpec(
            num_scalar_prefetch=0,
            grid=(steps,),
            in_specs=[
                pl.BlockSpec((m_blk, c_in), lambda i: (i, 0)),
                # Constant index maps -> fused weights / bias stay resident in VMEM.
                pl.BlockSpec((c_in, 3 * c_out), lambda i: (0, 0)),
                pl.BlockSpec((1, c_out), lambda i: (0, 0)),
            ],
            out_specs=pl.BlockSpec((m_blk, c_out), lambda i: (i, 0)),
        ),
        compiler_params=pltpu.CompilerParams(
            # Batch-chunk axis is fully independent -> megacore-shardable on v7x.
            dimension_semantics=("parallel",),
            vmem_limit_bytes=int(min(vmem_cap * 3 // 4, 96 << 20)),
        ),
    )(x2d, w_fused, b2)

    out = out2d.reshape(B_pad, L, c_out)
    return out[:B] if B_pad != B else out


def _reference(x, weight, bias):
    # Pure-JAX reference of the same circular dilated conv (for verification).
    y = jnp.zeros((x.shape[0], x.shape[1], weight.shape[0]), jnp.float32)
    for k, shift in zip(range(3), (2, 0, -2)):          # time offsets -2, 0, +2
        xs = jnp.roll(x, shift, axis=1)
        y = y + jnp.einsum("blc,oc->blo", xs.astype(jnp.float32),
                           weight[:, :, k].astype(jnp.float32))
    return (y + bias[None, None, :]).astype(x.dtype)


if __name__ == "__main__":
    key = jax.random.PRNGKey(0)
    B, L, c_in, c_out = 2, 8, 32, 16

    kx, kw, kb = jax.random.split(key, 3)
    x = jax.random.normal(kx, (B, L, c_in), dtype=jnp.float32)
    # Deterministic synthetic parameters (Conv1d weight layout: (c_out, c_in, 3)).
    bound = 1.0 / jnp.sqrt(c_in * 3.0)
    weight = jax.random.uniform(kw, (c_out, c_in, 3), jnp.float32, -bound, bound)
    bias = jax.random.uniform(kb, (c_out,), jnp.float32, -bound, bound)

    ref = _reference(x, weight, bias)

    # Default path: bf16 MXU operands (bf16-native on v5e/v6e/v7x), f32 accumulate.
    out = jax.block_until_ready(linear_forward(x, weight, bias))
    assert out.shape == (B, L, c_out)
    assert jnp.allclose(out, ref, atol=5e-2, rtol=5e-2)

    # f32-operand override: exact match to the f32 reference.
    out_f32 = jax.block_until_ready(
        linear_forward(x, weight, bias, compute_dtype=jnp.float32))
    assert jnp.allclose(out_f32, ref, atol=1e-4, rtol=1e-4)

    # Ragged batch (exercises the pad-and-slice path) with an explicit batch chunk.
    x3 = jax.random.normal(kx, (3, L, c_in), dtype=jnp.float32)
    out3 = jax.block_until_ready(linear_forward(x3, weight, bias, block_b=2))
    assert out3.shape == (3, L, c_out)
    assert jnp.allclose(out3, _reference(x3, weight, bias), atol=5e-2, rtol=5e-2)

    print("KERNEL_OK")
</pallas_src>

<mosaic_0001>
module attributes {stable_mosaic.version = 11 : i64} {
  func.func @_conv1d_circ_kernel(%arg0: i32, %arg1: memref<16x32xbf16, #tpu.memory_space<vmem>>, %arg2: memref<32x48xbf16, #tpu.memory_space<vmem>>, %arg3: memref<1x16xf32, #tpu.memory_space<vmem>>, %arg4: memref<16x16xf32, #tpu.memory_space<vmem>>) attributes {dimension_semantics = [#tpu.dimension_semantics<parallel>], iteration_bounds = array<i64: 1>, scalar_prefetch = 0 : i64, scratch_operands = 0 : i64, tpu.core_type = #tpu.core_type<tc>, window_params = [{transform_indices = @transform_0, window_bounds = array<i64: 16, 32>}, {pipeline_mode = #tpu.pipeline_mode<synchronous>, transform_indices = @transform_1, window_bounds = array<i64: 32, 48>}, {pipeline_mode = #tpu.pipeline_mode<synchronous>, transform_indices = @transform_2, window_bounds = array<i64: 1, 16>}, {transform_indices = @transform_3, window_bounds = array<i64: 16, 16>}]} {
    %c0 = arith.constant 0 : index
    %c0_0 = arith.constant 0 : index
    %0 = vector.load %arg1[%c0, %c0_0] : memref<16x32xbf16, #tpu.memory_space<vmem>>, vector<16x32xbf16>
    %c0_1 = arith.constant 0 : index
    %c0_2 = arith.constant 0 : index
    %1 = vector.load %arg2[%c0_1, %c0_2] : memref<32x48xbf16, #tpu.memory_space<vmem>>, vector<32x48xbf16>
    %cst = arith.constant dense<0.000000e+00> : vector<16x48xf32>
    %2 = tpu.matmul %0, %1, %cst {dimension_numbers = #tpu.dot_dimension_numbers<[1], [0], [0], [1], [0, 0, 1, 1], [], []>} : vector<16x32xbf16>, vector<32x48xbf16>, vector<16x48xf32> -> vector<16x48xf32>
    %3 = vector.extract_strided_slice %2 {offsets = [0, 0], sizes = [16, 16], strides = [1, 1]} : vector<16x48xf32> to vector<16x16xf32>
    %4 = vector.extract_strided_slice %2 {offsets = [0, 16], sizes = [16, 16], strides = [1, 1]} : vector<16x48xf32> to vector<16x16xf32>
    %5 = vector.extract_strided_slice %2 {offsets = [0, 32], sizes = [16, 16], strides = [1, 1]} : vector<16x48xf32> to vector<16x16xf32>
    %6 = tpu.iota {dimensions = array<i32: 0>} : vector<16x1xi32>
    %c7_i32 = arith.constant 7 : i32
    %7 = vector.broadcast %c7_i32 : i32 to vector<16x1xi32>
    %8 = arith.andi %6, %7 : vector<16x1xi32>
    %c2_i32 = arith.constant 2 : i32
    %9 = vector.broadcast %c2_i32 : i32 to vector<16x1xi32>
    %10 = arith.cmpi slt, %8, %9 : vector<16x1xi32>
    %c10_i32 = arith.constant 10 : i32
    %11 = tpu.dynamic_rotate %3 by %c10_i32 dim 0 : vector<16x16xf32>, i32 -> vector<16x16xf32>
    %c2_i32_3 = arith.constant 2 : i32
    %12 = tpu.dynamic_rotate %3 by %c2_i32_3 dim 0 : vector<16x16xf32>, i32 -> vector<16x16xf32>
    %13 = vector.shape_cast %10 : vector<16x1xi1> to vector<16x1xi1>
    %14 = vector.broadcast %13 : vector<16x1xi1> to vector<16x16xi1>
    %15 = arith.select %14, %11, %12 : vector<16x16xi1>, vector<16x16xf32>
    %c6_i32 = arith.constant 6 : i32
    %16 = vector.broadcast %c6_i32 : i32 to vector<16x1xi32>
    %17 = arith.cmpi sge, %8, %16 : vector<16x1xi32>
    %c6_i32_4 = arith.constant 6 : i32
    %18 = tpu.dynamic_rotate %5 by %c6_i32_4 dim 0 : vector<16x16xf32>, i32 -> vector<16x16xf32>
    %c14_i32 = arith.constant 14 : i32
    %19 = tpu.dynamic_rotate %5 by %c14_i32 dim 0 : vector<16x16xf32>, i32 -> vector<16x16xf32>
    %20 = vector.shape_cast %17 : vector<16x1xi1> to vector<16x1xi1>
    %21 = vector.broadcast %20 : vector<16x1xi1> to vector<16x16xi1>
    %22 = arith.select %21, %18, %19 : vector<16x16xi1>, vector<16x16xf32>
    %23 = arith.addf %15, %4 : vector<16x16xf32>
    %24 = arith.addf %23, %22 : vector<16x16xf32>
    %c0_5 = arith.constant 0 : index
    %c0_6 = arith.constant 0 : index
    %25 = vector.load %arg3[%c0_5, %c0_6] : memref<1x16xf32, #tpu.memory_space<vmem>>, vector<1x16xf32>
    %26 = vector.broadcast %25 : vector<1x16xf32> to vector<16x16xf32>
    %27 = arith.addf %24, %26 : vector<16x16xf32>
    %c0_7 = arith.constant 0 : index
    %c0_8 = arith.constant 0 : index
    %28 = vector.load %arg4[%c0_7, %c0_8] : memref<16x16xf32, #tpu.memory_space<vmem>>, vector<16x16xf32>
    tpu.vector_store %arg4[%c0_7, %c0_8], %27 {strides = array<i32>} : memref<16x16xf32, #tpu.memory_space<vmem>>, vector<16x16xf32>,
    return
  }
  func.func @transform_0(%arg0: i32) -> (i32, i32) {
    %c0_i32 = arith.constant 0 : i32
    %c0_i32_0 = arith.constant 0 : i32
    return %arg0, %c0_i32 : i32, i32
  }
  func.func @transform_1(%arg0: i32) -> (i32, i32) {
    %c0_i32 = arith.constant 0 : i32
    %c0_i32_0 = arith.constant 0 : i32
    %c0_i32_1 = arith.constant 0 : i32
    return %c0_i32, %c0_i32_0 : i32, i32
  }
  func.func @transform_2(%arg0: i32) -> (i32, i32) {
    %c0_i32 = arith.constant 0 : i32
    %c0_i32_0 = arith.constant 0 : i32
    %c0_i32_1 = arith.constant 0 : i32
    return %c0_i32, %c0_i32_0 : i32, i32
  }
  func.func @transform_3(%arg0: i32) -> (i32, i32) {
    %c0_i32 = arith.constant 0 : i32
    %c0_i32_0 = arith.constant 0 : i32
    return %arg0, %c0_i32 : i32, i32
  }
}

</mosaic_0001>

<llo_original>
// kernel: tpu_custom_call.1
$region0: #{tpu_custom_call.1}
  #allocation0 [shape = 'u32[]', space=smem, size = 0x4, offset = 0x4, fixed_abs, tag = 'smem constant byte address 0x4 - core index']
  #allocation1 [shape = 'u32[144,128]{1,0:T(1,128)}', space=vmem, size = 0x12000, scoped, tag = 'internal scratch']
  %s0 = inlined_call_operand.hbm [shape: bf16[16,32], index: 0, kind: input, shape index: {}]
  %s1 = inlined_call_operand.hbm [shape: bf16[32,48], index: 1, kind: input, shape index: {}]
  %s2 = inlined_call_operand.vmem [shape: f32[1,16], index: 2, kind: input, shape index: {}]
  %s3 = inlined_call_operand.hbm [shape: f32[16,16], index: 3, kind: output, shape index: {}]
  %s4 = sld [smem:[#allocation0]]
  $region30: #{tpu_custom_call.1} parent=0
    _
  %s6 = ssub.s32 1, %s4
  %s7 = scalar_select 0, %s6, %s4
  $region1: #{tpu_custom_call.1} parent=0
    #allocation2 [shape = 'u8[4096]{0}', space=vmem, size = 0x1000, scoped, tag = 'input window, operand 0, single buffered']
    #allocation3 [shape = 's32[1]{0}', space=sflag, size = 0x4, scoped, tag = 'scoped memory for tpu_custom_call.1']
    #allocation4 [shape = 's32[1]{0}', space=sflag, size = 0x4, scoped, tag = 'scoped memory for tpu_custom_call.1']
    #allocation5 [shape = 'u8[8192]{0}', space=vmem, size = 0x2000, scoped, tag = 'input window, operand 1, single buffered']
    #allocation6 [shape = 's32[1]{0}', space=sflag, size = 0x4, scoped, tag = 'scoped memory for tpu_custom_call.1']
    #allocation7 [shape = 'u8[8192]{0}', space=vmem, size = 0x2000, scoped, tag = 'output window, operand 0, single buffered']
    %8 = vsyncpa [#allocation3], 0
    %9 = vsyncpa [#allocation6], 0
    %10 = vsyncpa [#allocation4], 0
    // Predicated region
    $region2: #{tpu_custom_call.1} parent=1 // pred_check
      _
    $region3: #{tpu_custom_call.1} parent=1 // pred_check_branch
      %12 = sbr.rel (0) target = $region5
    $region4: #{tpu_custom_call.1} parent=1 // pred_region
      %s14 = ssub.s32 128, 128
      %15 = vsyncadd [#allocation3], %s14
      %s16 = sshll.u32 [#allocation2], 4
      %s17 = int_to_ptr.vmem [resolvable:$true] %s16
      %22 = dma.hbm_to_vmem [thread:$0]  %s0, 128, %s17, [#allocation3], 64, 64, 4
    $region5: #{tpu_custom_call.1} parent=1 // pred_fallthru
      _
    // Predicated region
    $region6: #{tpu_custom_call.1} parent=1 // pred_check
      _
    $region7: #{tpu_custom_call.1} parent=1 // pred_check_branch
      %24 = sbr.rel (0) target = $region9
    $region8: #{tpu_custom_call.1} parent=1 // pred_region
      %s26 = ssub.s32 256, 256
      %27 = vsyncadd [#allocation6], %s26
      %s28 = sshll.u32 [#allocation5], 4
      %s29 = int_to_ptr.vmem [resolvable:$true] %s28
      %34 = dma.hbm_to_vmem [thread:$0]  %s1, 256, %s29, [#allocation6], 64, 64, 4
    $region9: #{tpu_custom_call.1} parent=1 // pred_fallthru
      _
    // Predicated region
    $region10: #{tpu_custom_call.1} parent=1 // pred_check
      _
    $region11: #{tpu_custom_call.1} parent=1 // pred_check_branch
      %36 = sbr.rel (0) target = $region13
    $region12: #{tpu_custom_call.1} parent=1 // pred_region
      _
    $region13: #{tpu_custom_call.1} parent=1 // pred_fallthru
      _
    // Predicated region
    $region14: #{tpu_custom_call.1} parent=1 // pred_check
      _
    $region15: #{tpu_custom_call.1} parent=1 // pred_check_branch
      %38 = sbr.rel (0) target = $region17
    $region16: #{tpu_custom_call.1} parent=1 // pred_region
      %39 = dma.done [#allocation3], 128
    $region17: #{tpu_custom_call.1} parent=1 // pred_fallthru
      _
    // Predicated region
    $region18: #{tpu_custom_call.1} parent=1 // pred_check
      _
    $region19: #{tpu_custom_call.1} parent=1 // pred_check_branch
      %41 = sbr.rel (0) target = $region21
    $region20: #{tpu_custom_call.1} parent=1 // pred_region
      %42 = dma.done [#allocation6], 256
    $region21: #{tpu_custom_call.1} parent=1 // pred_fallthru
      _
    %v44 = vld [vmem:[#allocation2] sm:$0xf]
    %v45 = vld [vmem:[#allocation2 + $0x4] sm:$0xf]
    %v46 = vld [vmem:[#allocation5] sm:$0xf]
    %v47 = vld [vmem:[#allocation5 + $0x4] sm:$0xf]
    %v48 = vld [vmem:[#allocation5 + $0x8] sm:$0xf]
    %v49 = vld [vmem:[#allocation5 + $0xc] sm:$0xf]
    %v52 = vunpack.c.l.b16 %v44
    %v53 = vunpack.c.l.b16 %v45
    %v54 = vpack.c.b16 %v53, %v52
    %v59 = vunpack.c.l.b16 %v46
    %v60 = vunpack.c.l.b16 %v47
    %v61 = vunpack.c.l.b16 %v48
    %v62 = vunpack.c.l.b16 %v49
    %v63 = vpack.c.b16 %v60, %v59
    %v64 = vpack.c.b16 %v62, %v61
    %vm67 = vcmask 261120
    %v69 = vsel %vm67, %v54, 0
    %71 = vmatprep.subr.bf16.mxu0 0
    %72 = vmatpush1.bf16.msra.mxu0 %v63
    %73 = vmatprep.subr.bf16.mxu0 0
    %74 = vmatpush1.bf16.msra.mxu0 %v64
    %75 = vmatprep.subr.bf16.mxu0 0
    %76 = vmatpush1.bf16.msra.mxu0 0
    %77 = vmatprep.subr.bf16.mxu0 0
    %78 = vmatpush1.bf16.msra.mxu0 0
    %79 = vmatprep.subr.bf16.mxu0 0
    %80 = vmatpush1.bf16.msra.mxu0 0
    %81 = vmatprep.subr.bf16.mxu0 0
    %82 = vmatpush1.bf16.msra.mxu0 0
    %83 = vmatprep.subr.bf16.mxu0 0
    %84 = vmatpush1.bf16.msra.mxu0 0
    %85 = vmatprep.subr.bf16.mxu0 0
    %86 = vmatpush1.bf16.msra.mxu0 0
    %87 = vmatprep.subr.bf16.mxu0 0
    %88 = vmatpush1.bf16.msra.mxu0 0
    %89 = vmatprep.subr.bf16.mxu0 0
    %90 = vmatpush1.bf16.msra.mxu0 0
    %91 = vmatprep.subr.bf16.mxu0 0
    %92 = vmatpush1.bf16.msra.mxu0 0
    %93 = vmatprep.subr.bf16.mxu0 0
    %94 = vmatpush1.bf16.msra.mxu0 0
    %95 = vmatprep.subr.bf16.mxu0 0
    %96 = vmatpush1.bf16.msra.mxu0 0
    %97 = vmatprep.subr.bf16.mxu0 0
    %98 = vmatpush1.bf16.msra.mxu0 0
    %99 = vmatprep.subr.bf16.mxu0 0
    %100 = vmatpush1.bf16.msra.mxu0 0
    %101 = vmatprep.subr.bf16.mxu0 0
    %102 = vmatpush1.bf16.msra.mxu0 0
    %103 = vmatprep.mubr.bf16.mxu0 0
    %104 = vmatmul.mubr.bf16.gmra.mrb[0].mxu0 %v69
    %v105 = vpop.f32.mrb[0].mxu0
    %v106 = vadd.f32 0.0, %v105
    %v107 = vpop.f32.mrb[0].mxu0
    %v108 = vpop.f32.mrb[0].mxu0
    %v109 = vadd.f32 0.0, %v108
    %v110 = vpop.f32.mrb[0].mxu0
    %111 = vdwg.mxu0
    %v112 = vlaneseq
    %v113 = vshrl.u32 %v112, 7
    %v114 = vadd.s32 %v113, 8
    %v115 = vand.u32 %v113, 7
    %v116 = vand.u32 %v114, 7
    %vm117 = vcmp.lt.s32.totalorder %v115, 2
    %vm118 = vcmp.lt.s32.totalorder %v116, 2
    %v119 = vrot.slane %v106, 6
    %v120 = vrot.slane %v109, 6
    %vm121 = vcmp.lt.s32.totalorder %v113, 2
    %v122 = vsel %vm121, %v119, %v120
    %v123 = vsel %vm121, %v120, %v119
    %v124 = vsel %vm117, 1, 0
    %v125 = vsel %vm118, 1, 0
    %vm126 = vcmp.eq.s32.totalorder %v124, 1
    %vm127 = vcmp.eq.s32.totalorder %v125, 1
    %v128 = vsel %vm126, %v122, %v123
    %v129 = vsel %vm127, %v123, %v122
    %vm130 = vcmp.ge.s32.totalorder %v115, 6
    %vm131 = vcmp.ge.s32.totalorder %v116, 6
    %134 = vrot.lane.b32.xlu0 %v106, 96
    %v135 = vpop.permute.xlu0 %134
    %136 = vrot.lane.b32.xlu0 %v109, 96
    %v137 = vpop.permute.xlu0 %136
    %v140 = vrot.slane %v135, 2
    %v141 = vrot.slane %v137, 2
    %vm142 = vcmp.lt.s32.totalorder %v113, 6
    %v143 = vsel %vm142, %v140, %v141
    %v144 = vsel %vm142, %v141, %v140
    %v145 = vsel %vm130, 1, 0
    %v146 = vsel %vm131, 1, 0
    %vm147 = vcmp.eq.s32.totalorder %v145, 1
    %vm148 = vcmp.eq.s32.totalorder %v146, 1
    %v149 = vsel %vm147, %v144, %v143
    %v150 = vsel %vm148, %v143, %v144
    %151 = vrot.lane.b32.xlu0 %v106, 112
    %v152 = vpop.permute.xlu0 %151
    %153 = vrot.lane.b32.xlu0 %v109, 112
    %v154 = vpop.permute.xlu0 %153
    %v157 = vadd.f32 %v128, %v152
    %v158 = vadd.f32 %v129, %v154
    %v159 = vadd.f32 %v157, %v149
    %v160 = vadd.f32 %v158, %v150
    %v161 = vld [vmem:[%s2] sm:$0x1]
    %v163 = vlaneseq
    %v164 = vshrl.u32 %v163, 7
    %v165 = vsub.s32 0, %v164
    %v166 = vrot.slane %v161, %v165
    %v168 = vadd.f32 %v159, %v166
    %v169 = vadd.f32 %v160, %v166
    %vm170 = vcmask 130048
    %171 = vst.msk [vmem:[#allocation7] sm:$0xff] %vm170, %v168
    %172 = vst.msk [vmem:[#allocation7 + $0x8] sm:$0xff] %vm170, %v169
    // Predicated region
    $region22: #{tpu_custom_call.1} parent=1 // pred_check
      _
    $region23: #{tpu_custom_call.1} parent=1 // pred_check_branch
      %174 = sbr.rel (0) target = $region25
    $region24: #{tpu_custom_call.1} parent=1 // pred_region
      %s176 = ssub.s32 256, 256
      %177 = vsyncadd [#allocation4], %s176
      %s178 = sshll.u32 [#allocation7], 4
      %s179 = int_to_ptr.vmem [resolvable:$true] %s178
      %184 = dma.vmem_to_hbm [thread:$0]  %s179, 256, %s3, [#allocation4], 128, 128, 8
    $region25: #{tpu_custom_call.1} parent=1 // pred_fallthru
      _
    // Predicated region
    $region26: #{tpu_custom_call.1} parent=1 // pred_check
      _
    $region27: #{tpu_custom_call.1} parent=1 // pred_check_branch
      %186 = sbr.rel (0) target = $region29
    $region28: #{tpu_custom_call.1} parent=1 // pred_region
      %187 = dma.done [#allocation4], 256
    $region29: #{tpu_custom_call.1} parent=1 // pred_fallthru
      _
    %188 = vsyncpa [#allocation3], 1
    %189 = vsyncpa [#allocation6], 1
    %190 = vsyncpa [#allocation4], 1

</llo_original>
